<compile_context>
chip_gen: v7x
topology: tpu7x:2x2x1
jax: 0.10.0
libtpu: 0.0.40
codegen_flags: <defaults>
</compile_context>

<pallas_src>
from functools import partial

import numpy as np
import jax
import jax.numpy as jnp
from jax import lax
from jax.experimental import pallas as pl
from jax.experimental.pallas import tpu as pltpu


def _banded_conv_weights(w_hwio, stride, wo, w_in):
    """(3, 3, ci, co) conv weights -> (3*w_in*ci, wo*co) banded matrix, pad=1 folded in.

    With input row lanes = (x, ci) over the UNPADDED width and the three kernel-row bands
    concatenated along K (band dy at offset dy*w_in*ci), a 3x3 "same" conv becomes one
    matmul whose output lanes are (x0, co):
        W[dy*w_in*ci + x*ci + i, x0*co + o] = w[dy, dx, i, o]  with x = x0*stride + dx - 1,
    dropping taps with x outside [0, w_in) (that is the folded W-padding).
    """
    kh, kw, ci, co = w_hwio.shape
    blocks = []
    for dy in range(kh):
        acc = jnp.zeros((w_in, ci, wo, co), jnp.float32)
        for dx in range(kw):
            xs = np.arange(wo) * stride + dx - 1
            ok = (xs >= 0) & (xs < w_in)
            sel = np.zeros((w_in, wo), np.float32)
            sel[xs[ok], np.arange(wo)[ok]] = 1.0
            acc = acc + jnp.asarray(sel)[:, None, :, None] * w_hwio[dy, dx][None, :, None, :]
        blocks.append(acc.reshape(w_in * ci, wo * co))
    return jnp.concatenate(blocks, axis=0)           # (3*w_in*ci, wo*co)


def _basic_transform_kernel(stride, h_in, ho, wo, cout, eps,
                            xrow_ref, wa_ref, wb_ref,
                            ga_ref, ba_ref, gb_ref, bb_ref,
                            out_ref):
    n = xrow_ref.shape[0]
    lanes = wo * cout                       # lane-dense width of the activation slab
    inv_cnt = 1.0 / float(n * ho * wo)      # elements per channel for BN batch stats

    def band(src, dy, s, hin):
        """Rows src[y0*s + dy - 1] for y0 in [0, ho), zero rows where out of range."""
        nb, _, d = src.shape
        y0_lo = 1 if dy == 0 else 0
        y0_hi = min(ho - 1, (hin - dy) // s)
        cnt = y0_hi - y0_lo + 1
        r_lo = y0_lo * s + dy - 1
        rows = lax.slice(src, (0, r_lo, 0),
                         (nb, r_lo + s * (cnt - 1) + 1, d), (1, s, 1))
        parts = []
        if y0_lo > 0:
            parts.append(jnp.zeros((nb, y0_lo, d), src.dtype))
        parts.append(rows)
        if y0_hi < ho - 1:
            parts.append(jnp.zeros((nb, ho - 1 - y0_hi, d), src.dtype))
        return parts[0] if len(parts) == 1 else jnp.concatenate(parts, axis=1)

    def conv3(src, w_ref, s, hin):
        # 3x3 conv as ONE banded matmul: concat the 3 dy-bands along K, vstacked weights.
        xb = jnp.concatenate([band(src, dy, s, hin) for dy in range(3)], axis=-1)
        nb = xb.shape[0]
        return jnp.dot(xb.reshape(nb * ho, xb.shape[-1]), w_ref[...],
                       preferred_element_type=jnp.float32)   # (n*ho, wo*cout) f32

    def chan_reduce(row):
        # row: (1, lanes), lanes = (x0, channel).  Log-step circular lane rolls leave the
        # per-channel sum (over all x0 groups) replicated into every lane of that channel.
        shift = cout
        while shift < lanes:
            row = row + pltpu.roll(row, shift=shift, axis=1)
            shift *= 2
        return row

    def batch_norm(acc, g_ref, b_ref):
        # Train-mode batch stats per output channel (centered variance, PyTorch parity).
        mean = chan_reduce(jnp.sum(acc, axis=0, keepdims=True)) * inv_cnt
        d = acc - mean
        var = chan_reduce(jnp.sum(d * d, axis=0, keepdims=True)) * inv_cnt
        return d * lax.rsqrt(var + eps) * g_ref[...] + b_ref[...]

    # ---- conv a -> BN a -> ReLU (elementwise math stays f32; only MXU operands narrow) ----
    y = jnp.maximum(batch_norm(conv3(xrow_ref[...], wa_ref, stride, h_in),
                               ga_ref, ba_ref), 0.0)
    yc = y.reshape(n, ho, lanes).astype(wb_ref.dtype)   # single cast of the small activation

    # ---- conv b -> BN b (no trailing ReLU in BasicTransform) ----
    z = batch_norm(conv3(yc, wb_ref, 1, ho), gb_ref, bb_ref)

    # single lane-dense (n*ho, 128) store
    out_ref[...] = z.astype(out_ref.dtype)


def basic_transform(x_nchw, wa_hwio, ga, ba, wb_hwio, gb, bb, *, stride=1, eps=1e-5,
                    compute_dtype=jnp.bfloat16):
    """Forward pass of BasicTransform.  x_nchw: (N, C_in, H, W) float32 (PyTorch layout)."""
    n, cin, h, w = x_nchw.shape
    cout = wa_hwio.shape[-1]
    ho = (h + 2 - 3) // stride + 1
    wo = (w + 2 - 3) // stride + 1
    lanes = wo * cout
    assert wo & (wo - 1) == 0, "log-step lane reduce assumes power-of-two output width"

    # -- wrapper-side glue: layout only, no padding pass (pad folded into weights/bands) --
    x = jnp.transpose(x_nchw, (0, 2, 3, 1))                       # NCHW -> NHWC
    xrow = x.reshape(n, h, w * cin).astype(compute_dtype)

    wa_big = _banded_conv_weights(wa_hwio.astype(jnp.float32), stride, wo, w
                                  ).astype(compute_dtype)          # (3*w*cin, lanes)
    wb_big = _banded_conv_weights(wb_hwio.astype(jnp.float32), 1, wo, wo
                                  ).astype(compute_dtype)          # (3*lanes, lanes)

    ga_rep = jnp.tile(ga.astype(jnp.float32), wo).reshape(1, lanes)
    ba_rep = jnp.tile(ba.astype(jnp.float32), wo).reshape(1, lanes)
    gb_rep = jnp.tile(gb.astype(jnp.float32), wo).reshape(1, lanes)
    bb_rep = jnp.tile(bb.astype(jnp.float32), wo).reshape(1, lanes)

    full = lambda shape: pl.BlockSpec(shape, lambda i: (0,) * len(shape))

    out2d = pl.pallas_call(
        partial(_basic_transform_kernel, stride, h, ho, wo, cout, eps),
        out_shape=jax.ShapeDtypeStruct((n * ho, lanes), jnp.float32),
        grid=(1,),
        in_specs=[
            full(xrow.shape), full(wa_big.shape), full(wb_big.shape),
            full(ga_rep.shape), full(ba_rep.shape), full(gb_rep.shape), full(bb_rep.shape),
        ],
        out_specs=full((n * ho, lanes)),
        compiler_params=pltpu.CompilerParams(
            dimension_semantics=("arbitrary",),
            vmem_limit_bytes=32 * 1024 * 1024),
    )(xrow, wa_big, wb_big, ga_rep, ba_rep, gb_rep, bb_rep)

    out = out2d.reshape(n, ho, wo, cout)
    return jnp.transpose(out, (0, 3, 1, 2))                       # back to NCHW


def _ref_forward(x_nchw, wa_hwio, ga, ba, wb_hwio, gb, bb, stride, eps):
    """Pure-JAX f32 reference (lax conv + train-mode BN), same semantics as the module."""
    dn = ("NHWC", "HWIO", "NHWC")
    x = jnp.transpose(x_nchw, (0, 2, 3, 1)).astype(jnp.float32)

    def bn(t, g, b):
        mu = jnp.mean(t, axis=(0, 1, 2), keepdims=True)
        var = jnp.mean((t - mu) ** 2, axis=(0, 1, 2), keepdims=True)
        return (t - mu) * lax.rsqrt(var + eps) * g + b

    a = lax.conv_general_dilated(x, wa_hwio, (stride, stride),
                                 [(1, 1), (1, 1)], dimension_numbers=dn)
    a = jnp.maximum(bn(a, ga, ba), 0.0)
    b = lax.conv_general_dilated(a, wb_hwio, (1, 1),
                                 [(1, 1), (1, 1)], dimension_numbers=dn)
    b = bn(b, gb, bb)
    return jnp.transpose(b, (0, 3, 1, 2))


if __name__ == "__main__":
    N, CIN, H, W = 2, 4, 16, 16
    COUT, STRIDE = 8, 1

    key = jax.random.PRNGKey(0)
    kx, ka, kb = jax.random.split(key, 3)

    x = jax.random.normal(kx, (N, CIN, H, W), jnp.float32)
    # conv weights (kaiming-like scale), HWIO layout; BN affine params at PyTorch defaults
    wa = jax.random.normal(ka, (3, 3, CIN, COUT), jnp.float32) * (2.0 / (9 * CIN)) ** 0.5
    wb = jax.random.normal(kb, (3, 3, COUT, COUT), jnp.float32) * (2.0 / (9 * COUT)) ** 0.5
    ga, ba = jnp.ones((COUT,), jnp.float32), jnp.zeros((COUT,), jnp.float32)
    gb, bb = jnp.ones((COUT,), jnp.float32), jnp.zeros((COUT,), jnp.float32)

    ref = _ref_forward(x, wa, ga, ba, wb, gb, bb, STRIDE, 1e-5)

    # exact-math validation path (f32 MXU operands)
    out_f32 = jax.block_until_ready(
        basic_transform(x, wa, ga, ba, wb, gb, bb, stride=STRIDE,
                        compute_dtype=jnp.float32))
    assert out_f32.shape == ref.shape == (N, COUT, H // STRIDE, W // STRIDE)
    err_f32 = float(jnp.max(jnp.abs(out_f32 - ref)))
    assert err_f32 < 1e-3, f"f32-mode max abs error {err_f32}"

    # performance default (bf16 MXU operands, f32 accumulation + f32 BN/ReLU math)
    out_bf16 = jax.block_until_ready(
        basic_transform(x, wa, ga, ba, wb, gb, bb, stride=STRIDE))
    err_bf16 = float(jnp.max(jnp.abs(out_bf16 - ref)))
    assert err_bf16 < 3e-2, f"bf16-mode max abs error {err_bf16}"

    print("KERNEL_OK")
</pallas_src>

<mosaic_0001>
module attributes {stable_mosaic.version = 11 : i64} {
  func.func @_basic_transform_kernel(%arg0: i32, %arg1: memref<2x16x64xf32, #tpu.memory_space<vmem>>, %arg2: memref<192x128xf32, #tpu.memory_space<vmem>>, %arg3: memref<384x128xf32, #tpu.memory_space<vmem>>, %arg4: memref<1x128xf32, #tpu.memory_space<vmem>>, %arg5: memref<1x128xf32, #tpu.memory_space<vmem>>, %arg6: memref<1x128xf32, #tpu.memory_space<vmem>>, %arg7: memref<1x128xf32, #tpu.memory_space<vmem>>, %arg8: memref<32x128xf32, #tpu.memory_space<vmem>>) attributes {dimension_semantics = [#tpu.dimension_semantics<arbitrary>], iteration_bounds = array<i64: 1>, scalar_prefetch = 0 : i64, scratch_operands = 0 : i64, tpu.core_type = #tpu.core_type<tc>, window_params = [{pipeline_mode = #tpu.pipeline_mode<synchronous>, transform_indices = @transform_0, window_bounds = array<i64: 2, 16, 64>}, {pipeline_mode = #tpu.pipeline_mode<synchronous>, transform_indices = @transform_1, window_bounds = array<i64: 192, 128>}, {pipeline_mode = #tpu.pipeline_mode<synchronous>, transform_indices = @transform_2, window_bounds = array<i64: 384, 128>}, {pipeline_mode = #tpu.pipeline_mode<synchronous>, transform_indices = @transform_3, window_bounds = array<i64: 1, 128>}, {pipeline_mode = #tpu.pipeline_mode<synchronous>, transform_indices = @transform_4, window_bounds = array<i64: 1, 128>}, {pipeline_mode = #tpu.pipeline_mode<synchronous>, transform_indices = @transform_5, window_bounds = array<i64: 1, 128>}, {pipeline_mode = #tpu.pipeline_mode<synchronous>, transform_indices = @transform_6, window_bounds = array<i64: 1, 128>}, {pipeline_mode = #tpu.pipeline_mode<synchronous>, transform_indices = @transform_7, window_bounds = array<i64: 32, 128>}]} {
    %c0 = arith.constant 0 : index
    %c0_0 = arith.constant 0 : index
    %c0_1 = arith.constant 0 : index
    %0 = vector.load %arg1[%c0, %c0_0, %c0_1] : memref<2x16x64xf32, #tpu.memory_space<vmem>>, vector<2x16x64xf32>
    %1 = vector.extract_strided_slice %0 {offsets = [0, 0, 0], sizes = [2, 15, 64], strides = [1, 1, 1]} : vector<2x16x64xf32> to vector<2x15x64xf32>
    %cst = arith.constant 0.000000e+00 : f32
    %2 = vector.broadcast %cst : f32 to vector<2x1x64xf32>
    %3 = tpu.concatenate %2, %1 in 1 : vector<2x1x64xf32>, vector<2x15x64xf32> -> vector<2x16x64xf32>
    %4 = vector.extract_strided_slice %0 {offsets = [0, 0, 0], sizes = [2, 16, 64], strides = [1, 1, 1]} : vector<2x16x64xf32> to vector<2x16x64xf32>
    %5 = vector.extract_strided_slice %0 {offsets = [0, 1, 0], sizes = [2, 15, 64], strides = [1, 1, 1]} : vector<2x16x64xf32> to vector<2x15x64xf32>
    %cst_2 = arith.constant 0.000000e+00 : f32
    %6 = vector.broadcast %cst_2 : f32 to vector<2x1x64xf32>
    %7 = tpu.concatenate %5, %6 in 1 : vector<2x15x64xf32>, vector<2x1x64xf32> -> vector<2x16x64xf32>
    %8 = tpu.concatenate %3, %4, %7 in 2 : vector<2x16x64xf32>, vector<2x16x64xf32>, vector<2x16x64xf32> -> vector<2x16x192xf32>
    %9 = vector.shape_cast %8 : vector<2x16x192xf32> to vector<32x192xf32>
    %c0_3 = arith.constant 0 : index
    %c0_4 = arith.constant 0 : index
    %10 = vector.load %arg2[%c0_3, %c0_4] : memref<192x128xf32, #tpu.memory_space<vmem>>, vector<192x128xf32>
    %cst_5 = arith.constant dense<0.000000e+00> : vector<32x128xf32>
    %11 = tpu.matmul %9, %10, %cst_5 {dimension_numbers = #tpu.dot_dimension_numbers<[1], [0], [0], [1], [0, 0, 1, 1], [], []>} : vector<32x192xf32>, vector<192x128xf32>, vector<32x128xf32> -> vector<32x128xf32>
    %cst_6 = arith.constant dense<0.000000e+00> : vector<128xf32>
    %12 = vector.multi_reduction <add>, %11, %cst_6 [0] : vector<32x128xf32> to vector<128xf32>
    %13 = vector.shape_cast %12 : vector<128xf32> to vector<1x128xf32>
    %c8_i32 = arith.constant 8 : i32
    %14 = tpu.dynamic_rotate %13 by %c8_i32 dim 1 : vector<1x128xf32>, i32 -> vector<1x128xf32>
    %15 = arith.addf %13, %14 : vector<1x128xf32>
    %c16_i32 = arith.constant 16 : i32
    %16 = tpu.dynamic_rotate %15 by %c16_i32 dim 1 : vector<1x128xf32>, i32 -> vector<1x128xf32>
    %17 = arith.addf %15, %16 : vector<1x128xf32>
    %c32_i32 = arith.constant 32 : i32
    %18 = tpu.dynamic_rotate %17 by %c32_i32 dim 1 : vector<1x128xf32>, i32 -> vector<1x128xf32>
    %19 = arith.addf %17, %18 : vector<1x128xf32>
    %c64_i32 = arith.constant 64 : i32
    %20 = tpu.dynamic_rotate %19 by %c64_i32 dim 1 : vector<1x128xf32>, i32 -> vector<1x128xf32>
    %21 = arith.addf %19, %20 : vector<1x128xf32>
    %cst_7 = arith.constant 0.001953125 : f32
    %22 = vector.broadcast %cst_7 : f32 to vector<1x128xf32>
    %23 = arith.mulf %21, %22 : vector<1x128xf32>
    %24 = vector.broadcast %23 : vector<1x128xf32> to vector<32x128xf32>
    %25 = arith.subf %11, %24 : vector<32x128xf32>
    %26 = arith.mulf %25, %25 : vector<32x128xf32>
    %cst_8 = arith.constant dense<0.000000e+00> : vector<128xf32>
    %27 = vector.multi_reduction <add>, %26, %cst_8 [0] : vector<32x128xf32> to vector<128xf32>
    %28 = vector.shape_cast %27 : vector<128xf32> to vector<1x128xf32>
    %c8_i32_9 = arith.constant 8 : i32
    %29 = tpu.dynamic_rotate %28 by %c8_i32_9 dim 1 : vector<1x128xf32>, i32 -> vector<1x128xf32>
    %30 = arith.addf %28, %29 : vector<1x128xf32>
    %c16_i32_10 = arith.constant 16 : i32
    %31 = tpu.dynamic_rotate %30 by %c16_i32_10 dim 1 : vector<1x128xf32>, i32 -> vector<1x128xf32>
    %32 = arith.addf %30, %31 : vector<1x128xf32>
    %c32_i32_11 = arith.constant 32 : i32
    %33 = tpu.dynamic_rotate %32 by %c32_i32_11 dim 1 : vector<1x128xf32>, i32 -> vector<1x128xf32>
    %34 = arith.addf %32, %33 : vector<1x128xf32>
    %c64_i32_12 = arith.constant 64 : i32
    %35 = tpu.dynamic_rotate %34 by %c64_i32_12 dim 1 : vector<1x128xf32>, i32 -> vector<1x128xf32>
    %36 = arith.addf %34, %35 : vector<1x128xf32>
    %cst_13 = arith.constant 0.001953125 : f32
    %37 = vector.broadcast %cst_13 : f32 to vector<1x128xf32>
    %38 = arith.mulf %36, %37 : vector<1x128xf32>
    %cst_14 = arith.constant 9.99999974E-6 : f32
    %39 = vector.broadcast %cst_14 : f32 to vector<1x128xf32>
    %40 = arith.addf %38, %39 : vector<1x128xf32>
    %41 = math.rsqrt %40 : vector<1x128xf32>
    %42 = vector.broadcast %41 : vector<1x128xf32> to vector<32x128xf32>
    %43 = arith.mulf %25, %42 : vector<32x128xf32>
    %c0_15 = arith.constant 0 : index
    %c0_16 = arith.constant 0 : index
    %44 = vector.load %arg4[%c0_15, %c0_16] : memref<1x128xf32, #tpu.memory_space<vmem>>, vector<1x128xf32>
    %45 = vector.broadcast %44 : vector<1x128xf32> to vector<32x128xf32>
    %46 = arith.mulf %43, %45 : vector<32x128xf32>
    %c0_17 = arith.constant 0 : index
    %c0_18 = arith.constant 0 : index
    %47 = vector.load %arg5[%c0_17, %c0_18] : memref<1x128xf32, #tpu.memory_space<vmem>>, vector<1x128xf32>
    %48 = vector.broadcast %47 : vector<1x128xf32> to vector<32x128xf32>
    %49 = arith.addf %46, %48 : vector<32x128xf32>
    %cst_19 = arith.constant 0.000000e+00 : f32
    %50 = vector.broadcast %cst_19 : f32 to vector<32x128xf32>
    %51 = arith.maximumf %49, %50 : vector<32x128xf32>
    %52 = vector.shape_cast %51 : vector<32x128xf32> to vector<2x16x128xf32>
    %53 = vector.extract_strided_slice %52 {offsets = [0, 0, 0], sizes = [2, 15, 128], strides = [1, 1, 1]} : vector<2x16x128xf32> to vector<2x15x128xf32>
    %cst_20 = arith.constant 0.000000e+00 : f32
    %54 = vector.broadcast %cst_20 : f32 to vector<2x1x128xf32>
    %55 = tpu.concatenate %54, %53 in 1 : vector<2x1x128xf32>, vector<2x15x128xf32> -> vector<2x16x128xf32>
    %56 = vector.extract_strided_slice %52 {offsets = [0, 0, 0], sizes = [2, 16, 128], strides = [1, 1, 1]} : vector<2x16x128xf32> to vector<2x16x128xf32>
    %57 = vector.extract_strided_slice %52 {offsets = [0, 1, 0], sizes = [2, 15, 128], strides = [1, 1, 1]} : vector<2x16x128xf32> to vector<2x15x128xf32>
    %cst_21 = arith.constant 0.000000e+00 : f32
    %58 = vector.broadcast %cst_21 : f32 to vector<2x1x128xf32>
    %59 = tpu.concatenate %57, %58 in 1 : vector<2x15x128xf32>, vector<2x1x128xf32> -> vector<2x16x128xf32>
    %60 = tpu.concatenate %55, %56, %59 in 2 : vector<2x16x128xf32>, vector<2x16x128xf32>, vector<2x16x128xf32> -> vector<2x16x384xf32>
    %61 = vector.shape_cast %60 : vector<2x16x384xf32> to vector<32x384xf32>
    %c0_22 = arith.constant 0 : index
    %c0_23 = arith.constant 0 : index
    %62 = vector.load %arg3[%c0_22, %c0_23] : memref<384x128xf32, #tpu.memory_space<vmem>>, vector<384x128xf32>
    %cst_24 = arith.constant dense<0.000000e+00> : vector<32x128xf32>
    %63 = tpu.matmul %61, %62, %cst_24 {dimension_numbers = #tpu.dot_dimension_numbers<[1], [0], [0], [1], [0, 0, 1, 1], [], []>} : vector<32x384xf32>, vector<384x128xf32>, vector<32x128xf32> -> vector<32x128xf32>
    %cst_25 = arith.constant dense<0.000000e+00> : vector<128xf32>
    %64 = vector.multi_reduction <add>, %63, %cst_25 [0] : vector<32x128xf32> to vector<128xf32>
    %65 = vector.shape_cast %64 : vector<128xf32> to vector<1x128xf32>
    %c8_i32_26 = arith.constant 8 : i32
    %66 = tpu.dynamic_rotate %65 by %c8_i32_26 dim 1 : vector<1x128xf32>, i32 -> vector<1x128xf32>
    %67 = arith.addf %65, %66 : vector<1x128xf32>
    %c16_i32_27 = arith.constant 16 : i32
    %68 = tpu.dynamic_rotate %67 by %c16_i32_27 dim 1 : vector<1x128xf32>, i32 -> vector<1x128xf32>
    %69 = arith.addf %67, %68 : vector<1x128xf32>
    %c32_i32_28 = arith.constant 32 : i32
    %70 = tpu.dynamic_rotate %69 by %c32_i32_28 dim 1 : vector<1x128xf32>, i32 -> vector<1x128xf32>
    %71 = arith.addf %69, %70 : vector<1x128xf32>
    %c64_i32_29 = arith.constant 64 : i32
    %72 = tpu.dynamic_rotate %71 by %c64_i32_29 dim 1 : vector<1x128xf32>, i32 -> vector<1x128xf32>
    %73 = arith.addf %71, %72 : vector<1x128xf32>
    %cst_30 = arith.constant 0.001953125 : f32
    %74 = vector.broadcast %cst_30 : f32 to vector<1x128xf32>
    %75 = arith.mulf %73, %74 : vector<1x128xf32>
    %76 = vector.broadcast %75 : vector<1x128xf32> to vector<32x128xf32>
    %77 = arith.subf %63, %76 : vector<32x128xf32>
    %78 = arith.mulf %77, %77 : vector<32x128xf32>
    %cst_31 = arith.constant dense<0.000000e+00> : vector<128xf32>
    %79 = vector.multi_reduction <add>, %78, %cst_31 [0] : vector<32x128xf32> to vector<128xf32>
    %80 = vector.shape_cast %79 : vector<128xf32> to vector<1x128xf32>
    %c8_i32_32 = arith.constant 8 : i32
    %81 = tpu.dynamic_rotate %80 by %c8_i32_32 dim 1 : vector<1x128xf32>, i32 -> vector<1x128xf32>
    %82 = arith.addf %80, %81 : vector<1x128xf32>
    %c16_i32_33 = arith.constant 16 : i32
    %83 = tpu.dynamic_rotate %82 by %c16_i32_33 dim 1 : vector<1x128xf32>, i32 -> vector<1x128xf32>
    %84 = arith.addf %82, %83 : vector<1x128xf32>
    %c32_i32_34 = arith.constant 32 : i32
    %85 = tpu.dynamic_rotate %84 by %c32_i32_34 dim 1 : vector<1x128xf32>, i32 -> vector<1x128xf32>
    %86 = arith.addf %84, %85 : vector<1x128xf32>
    %c64_i32_35 = arith.constant 64 : i32
    %87 = tpu.dynamic_rotate %86 by %c64_i32_35 dim 1 : vector<1x128xf32>, i32 -> vector<1x128xf32>
    %88 = arith.addf %86, %87 : vector<1x128xf32>
    %cst_36 = arith.constant 0.001953125 : f32
    %89 = vector.broadcast %cst_36 : f32 to vector<1x128xf32>
    %90 = arith.mulf %88, %89 : vector<1x128xf32>
    %cst_37 = arith.constant 9.99999974E-6 : f32
    %91 = vector.broadcast %cst_37 : f32 to vector<1x128xf32>
    %92 = arith.addf %90, %91 : vector<1x128xf32>
    %93 = math.rsqrt %92 : vector<1x128xf32>
    %94 = vector.broadcast %93 : vector<1x128xf32> to vector<32x128xf32>
    %95 = arith.mulf %77, %94 : vector<32x128xf32>
    %c0_38 = arith.constant 0 : index
    %c0_39 = arith.constant 0 : index
    %96 = vector.load %arg6[%c0_38, %c0_39] : memref<1x128xf32, #tpu.memory_space<vmem>>, vector<1x128xf32>
    %97 = vector.broadcast %96 : vector<1x128xf32> to vector<32x128xf32>
    %98 = arith.mulf %95, %97 : vector<32x128xf32>
    %c0_40 = arith.constant 0 : index
    %c0_41 = arith.constant 0 : index
    %99 = vector.load %arg7[%c0_40, %c0_41] : memref<1x128xf32, #tpu.memory_space<vmem>>, vector<1x128xf32>
    %100 = vector.broadcast %99 : vector<1x128xf32> to vector<32x128xf32>
    %101 = arith.addf %98, %100 : vector<32x128xf32>
    %c0_42 = arith.constant 0 : index
    %c0_43 = arith.constant 0 : index
    %102 = vector.load %arg8[%c0_42, %c0_43] : memref<32x128xf32, #tpu.memory_space<vmem>>, vector<32x128xf32>
    tpu.vector_store %arg8[%c0_42, %c0_43], %101 {strides = array<i32>} : memref<32x128xf32, #tpu.memory_space<vmem>>, vector<32x128xf32>,
    return
  }
  func.func @transform_0(%arg0: i32) -> (i32, i32, i32) {
    %c0_i32 = arith.constant 0 : i32
    %c0_i32_0 = arith.constant 0 : i32
    %c0_i32_1 = arith.constant 0 : i32
    %c0_i32_2 = arith.constant 0 : i32
    return %c0_i32, %c0_i32_0, %c0_i32_1 : i32, i32, i32
  }
  func.func @transform_1(%arg0: i32) -> (i32, i32) {
    %c0_i32 = arith.constant 0 : i32
    %c0_i32_0 = arith.constant 0 : i32
    %c0_i32_1 = arith.constant 0 : i32
    return %c0_i32, %c0_i32_0 : i32, i32
  }
  func.func @transform_2(%arg0: i32) -> (i32, i32) {
    %c0_i32 = arith.constant 0 : i32
    %c0_i32_0 = arith.constant 0 : i32
    %c0_i32_1 = arith.constant 0 : i32
    return %c0_i32, %c0_i32_0 : i32, i32
  }
  func.func @transform_3(%arg0: i32) -> (i32, i32) {
    %c0_i32 = arith.constant 0 : i32
    %c0_i32_0 = arith.constant 0 : i32
    %c0_i32_1 = arith.constant 0 : i32
    return %c0_i32, %c0_i32_0 : i32, i32
  }
  func.func @transform_4(%arg0: i32) -> (i32, i32) {
    %c0_i32 = arith.constant 0 : i32
    %c0_i32_0 = arith.constant 0 : i32
    %c0_i32_1 = arith.constant 0 : i32
    return %c0_i32, %c0_i32_0 : i32, i32
  }
  func.func @transform_5(%arg0: i32) -> (i32, i32) {
    %c0_i32 = arith.constant 0 : i32
    %c0_i32_0 = arith.constant 0 : i32
    %c0_i32_1 = arith.constant 0 : i32
    return %c0_i32, %c0_i32_0 : i32, i32
  }
  func.func @transform_6(%arg0: i32) -> (i32, i32) {
    %c0_i32 = arith.constant 0 : i32
    %c0_i32_0 = arith.constant 0 : i32
    %c0_i32_1 = arith.constant 0 : i32
    return %c0_i32, %c0_i32_0 : i32, i32
  }
  func.func @transform_7(%arg0: i32) -> (i32, i32) {
    %c0_i32 = arith.constant 0 : i32
    %c0_i32_0 = arith.constant 0 : i32
    %c0_i32_1 = arith.constant 0 : i32
    return %c0_i32, %c0_i32_0 : i32, i32
  }
}

</mosaic_0001>

<llo_original>
// kernel: tpu_custom_call.1
$region0: #{tpu_custom_call.1}
  #allocation0 [shape = 'u32[]', space=smem, size = 0x4, offset = 0x4, fixed_abs, tag = 'smem constant byte address 0x4 - core index']
  #allocation1 [shape = 'u32[144,128]{1,0:T(1,128)}', space=vmem, size = 0x12000, scoped, tag = 'internal scratch']
  %s0 = inlined_call_operand.hbm [shape: f32[2,16,64], index: 0, kind: input, shape index: {}]
  %s1 = inlined_call_operand.hbm [shape: f32[192,128], index: 1, kind: input, shape index: {}]
  %s2 = inlined_call_operand.hbm [shape: f32[384,128], index: 2, kind: input, shape index: {}]
  %s3 = inlined_call_operand.vmem [shape: f32[1,128], index: 3, kind: input, shape index: {}]
  %s4 = inlined_call_operand.vmem [shape: f32[1,128], index: 4, kind: input, shape index: {}]
  %s5 = inlined_call_operand.vmem [shape: f32[1,128], index: 5, kind: input, shape index: {}]
  %s6 = inlined_call_operand.vmem [shape: f32[1,128], index: 6, kind: input, shape index: {}]
  %s7 = inlined_call_operand.hbm [shape: f32[32,128], index: 7, kind: output, shape index: {}]
  %s8 = sld [smem:[#allocation0]]
  $region50: #{tpu_custom_call.1} parent=0
    _
  %s10 = ssub.s32 1, %s8
  %s11 = scalar_select 0, %s10, %s8
  $region1: #{tpu_custom_call.1} parent=0
    #allocation2 [shape = 'u8[16384]{0}', space=vmem, size = 0x4000, scoped, tag = 'input window, operand 0, single buffered']
    #allocation3 [shape = 's32[1]{0}', space=sflag, size = 0x4, scoped, tag = 'scoped memory for tpu_custom_call.1']
    #allocation4 [shape = 's32[1]{0}', space=sflag, size = 0x4, scoped, tag = 'scoped memory for tpu_custom_call.1']
    #allocation5 [shape = 'u8[98304]{0}', space=vmem, size = 0x18000, scoped, tag = 'input window, operand 1, single buffered']
    #allocation6 [shape = 's32[1]{0}', space=sflag, size = 0x4, scoped, tag = 'scoped memory for tpu_custom_call.1']
    #allocation7 [shape = 'u8[196608]{0}', space=vmem, size = 0x30000, scoped, tag = 'input window, operand 2, single buffered']
    #allocation8 [shape = 'u8[16384]{0}', space=vmem, size = 0x4000, scoped, tag = 'output window, operand 0, single buffered']
    %12 = vsyncpa [#allocation3], 0
    %13 = vsyncpa [#allocation6], 0
    %14 = vsyncpa [#allocation4], 0
    // Predicated region
    $region2: #{tpu_custom_call.1} parent=1 // pred_check
      _
    $region3: #{tpu_custom_call.1} parent=1 // pred_check_branch
      %16 = sbr.rel (0) target = $region5
    $region4: #{tpu_custom_call.1} parent=1 // pred_region
      %s18 = ssub.s32 512, 512
      %19 = vsyncadd [#allocation3], %s18
      %s20 = sshll.u32 [#allocation2], 4
      %s21 = int_to_ptr.vmem [resolvable:$true] %s20
      %26 = dma.hbm_to_vmem [thread:$0]  %s0, 512, %s21, [#allocation3], 128, 128, 8
    $region5: #{tpu_custom_call.1} parent=1 // pred_fallthru
      _
    // Predicated region
    $region6: #{tpu_custom_call.1} parent=1 // pred_check
      _
    $region7: #{tpu_custom_call.1} parent=1 // pred_check_branch
      %28 = sbr.rel (0) target = $region9
    $region8: #{tpu_custom_call.1} parent=1 // pred_region
      %s30 = ssub.s32 3072, 3072
      %31 = vsyncadd [#allocation6], %s30
      %s32 = sshll.u32 [#allocation5], 4
      %s33 = int_to_ptr.vmem [resolvable:$true] %s32
      %38 = dma.hbm_to_vmem [thread:$0]  %s1, 3072, %s33, [#allocation6], 128, 128, 8
    $region9: #{tpu_custom_call.1} parent=1 // pred_fallthru
      _
    // Predicated region
    $region10: #{tpu_custom_call.1} parent=1 // pred_check
      _
    $region11: #{tpu_custom_call.1} parent=1 // pred_check_branch
      %40 = sbr.rel (0) target = $region13
    $region12: #{tpu_custom_call.1} parent=1 // pred_region
      %s42 = ssub.s32 6144, 6144
      %43 = vsyncadd [#allocation6], %s42
      %s44 = sshll.u32 [#allocation7], 4
      %s45 = int_to_ptr.vmem [resolvable:$true] %s44
      %50 = dma.hbm_to_vmem [thread:$0]  %s2, 6144, %s45, [#allocation6], 128, 128, 8
    $region13: #{tpu_custom_call.1} parent=1 // pred_fallthru
      _
    // Predicated region
    $region14: #{tpu_custom_call.1} parent=1 // pred_check
      _
    $region15: #{tpu_custom_call.1} parent=1 // pred_check_branch
      %52 = sbr.rel (0) target = $region17
    $region16: #{tpu_custom_call.1} parent=1 // pred_region
      _
    $region17: #{tpu_custom_call.1} parent=1 // pred_fallthru
      _
    // Predicated region
    $region18: #{tpu_custom_call.1} parent=1 // pred_check
      _
    $region19: #{tpu_custom_call.1} parent=1 // pred_check_branch
      %54 = sbr.rel (0) target = $region21
    $region20: #{tpu_custom_call.1} parent=1 // pred_region
      _
    $region21: #{tpu_custom_call.1} parent=1 // pred_fallthru
      _
    // Predicated region
    $region22: #{tpu_custom_call.1} parent=1 // pred_check
      _
    $region23: #{tpu_custom_call.1} parent=1 // pred_check_branch
      %56 = sbr.rel (0) target = $region25
    $region24: #{tpu_custom_call.1} parent=1 // pred_region
      _
    $region25: #{tpu_custom_call.1} parent=1 // pred_fallthru
      _
    // Predicated region
    $region26: #{tpu_custom_call.1} parent=1 // pred_check
      _
    $region27: #{tpu_custom_call.1} parent=1 // pred_check_branch
      %58 = sbr.rel (0) target = $region29
    $region28: #{tpu_custom_call.1} parent=1 // pred_region
      _
    $region29: #{tpu_custom_call.1} parent=1 // pred_fallthru
      _
    // Predicated region
    $region30: #{tpu_custom_call.1} parent=1 // pred_check
      _
    $region31: #{tpu_custom_call.1} parent=1 // pred_check_branch
      %60 = sbr.rel (0) target = $region33
    $region32: #{tpu_custom_call.1} parent=1 // pred_region
      %61 = dma.done [#allocation3], 512
    $region33: #{tpu_custom_call.1} parent=1 // pred_fallthru
      _
    // Predicated region
    $region34: #{tpu_custom_call.1} parent=1 // pred_check
      _
    $region35: #{tpu_custom_call.1} parent=1 // pred_check_branch
      %63 = sbr.rel (0) target = $region37
    $region36: #{tpu_custom_call.1} parent=1 // pred_region
      %64 = dma.done [#allocation6], 3072
    $region37: #{tpu_custom_call.1} parent=1 // pred_fallthru
      _
    // Predicated region
    $region38: #{tpu_custom_call.1} parent=1 // pred_check
      _
    $region39: #{tpu_custom_call.1} parent=1 // pred_check_branch
      %66 = sbr.rel (0) target = $region41
    $region40: #{tpu_custom_call.1} parent=1 // pred_region
      %67 = dma.done [#allocation6], 6144
    $region41: #{tpu_custom_call.1} parent=1 // pred_fallthru
      _
    %v68 = vld [vmem:[#allocation2] sm:$0xff]
    %v69 = vld [vmem:[#allocation2 + $0x8] sm:$0xff]
    %v70 = vld [vmem:[#allocation2 + $0x10] sm:$0xff]
    %v71 = vld [vmem:[#allocation2 + $0x18] sm:$0xff]
    %vm76 = vcmask 1040384
    %v77 = vrot.slane %v68, 7
    %v78 = vrot.slane %v69, 7
    %v79 = vsel %vm76, %v77, %v78
    %v80 = vrot.slane %v70, 7
    %v81 = vrot.slane %v71, 7
    %v82 = vsel %vm76, %v80, %v81
    %v87 = vsel %vm76, 0.0, %v77
    %v88 = vsel %vm76, 0.0, %v80
    %vm89 = vcmask 1046528
    %v90 = vrot.slane %v68, 1
    %v91 = vrot.slane %v69, 1
    %v92 = vsel %vm89, %v90, %v91
    %v93 = vrot.slane %v70, 1
    %v94 = vrot.slane %v71, 1
    %v95 = vsel %vm89, %v93, %v94
    %v98 = vsel %vm89, %v91, 0.0
    %v99 = vsel %vm89, %v94, 0.0
    %100 = vrot.lane.b32.xlu0 %v68, 64
    %v101 = vpop.permute.xlu0 %100
    %102 = vrot.lane.b32.xlu0 %v69, 64
    %v103 = vpop.permute.xlu0 %102
    %104 = vrot.lane.b32.xlu0 %v70, 64
    %v105 = vpop.permute.xlu0 %104
    %106 = vrot.lane.b32.xlu0 %v71, 64
    %v107 = vpop.permute.xlu0 %106
    %vm112 = vcmask 523264
    %v113 = vsel %vm112, %v87, %v101
    %v114 = vsel %vm112, %v79, %v103
    %v115 = vsel %vm112, %v88, %v105
    %v116 = vsel %vm112, %v82, %v107
    %v117 = vld [vmem:[#allocation5] sm:$0xff]
    %v118 = vld [vmem:[#allocation5 + $0x8] sm:$0xff]
    %v119 = vld [vmem:[#allocation5 + $0x10] sm:$0xff]
    %v120 = vld [vmem:[#allocation5 + $0x18] sm:$0xff]
    %v121 = vld [vmem:[#allocation5 + $0x20] sm:$0xff]
    %v122 = vld [vmem:[#allocation5 + $0x28] sm:$0xff]
    %v123 = vld [vmem:[#allocation5 + $0x30] sm:$0xff]
    %v124 = vld [vmem:[#allocation5 + $0x38] sm:$0xff]
    %v125 = vld [vmem:[#allocation5 + $0x40] sm:$0xff]
    %v126 = vld [vmem:[#allocation5 + $0x48] sm:$0xff]
    %v127 = vld [vmem:[#allocation5 + $0x50] sm:$0xff]
    %v128 = vld [vmem:[#allocation5 + $0x58] sm:$0xff]
    %v129 = vld [vmem:[#allocation5 + $0x60] sm:$0xff]
    %v130 = vld [vmem:[#allocation5 + $0x68] sm:$0xff]
    %v131 = vld [vmem:[#allocation5 + $0x70] sm:$0xff]
    %v132 = vld [vmem:[#allocation5 + $0x78] sm:$0xff]
    %v133 = vld [vmem:[#allocation5 + $0x80] sm:$0xff]
    %v134 = vld [vmem:[#allocation5 + $0x88] sm:$0xff]
    %v135 = vld [vmem:[#allocation5 + $0x90] sm:$0xff]
    %v136 = vld [vmem:[#allocation5 + $0x98] sm:$0xff]
    %v137 = vld [vmem:[#allocation5 + $0xa0] sm:$0xff]
    %v138 = vld [vmem:[#allocation5 + $0xa8] sm:$0xff]
    %v139 = vld [vmem:[#allocation5 + $0xb0] sm:$0xff]
    %v140 = vld [vmem:[#allocation5 + $0xb8] sm:$0xff]
    %v141 = vsel %vm112, %v92, 0
    %v144 = vsel %vm112, %v98, 0
    %v146 = vsel %vm112, %v95, 0
    %v149 = vsel %vm112, %v99, 0
    %151 = vmatprep.subr.mxu0 0.0
    %152 = vmatpush1.msra.mxu0 %v117
    %153 = vmatprep.subr.mxu0 0.0
    %154 = vmatpush1.msra.mxu0 %v118
    %155 = vmatprep.subr.mxu0 0.0
    %156 = vmatpush1.msra.mxu0 %v119
    %157 = vmatprep.subr.mxu0 0.0
    %158 = vmatpush1.msra.mxu0 %v120
    %159 = vmatprep.subr.mxu0 0.0
    %160 = vmatpush1.msra.mxu0 %v121
    %161 = vmatprep.subr.mxu0 0.0
    %162 = vmatpush1.msra.mxu0 %v122
    %163 = vmatprep.subr.mxu0 0.0
    %164 = vmatpush1.msra.mxu0 %v123
    %165 = vmatprep.subr.mxu0 0.0
    %166 = vmatpush1.msra.mxu0 %v124
    %167 = vmatprep.subr.mxu0 0.0
    %168 = vmatpush1.msra.mxu0 %v125
    %169 = vmatprep.subr.mxu0 0.0
    %170 = vmatpush1.msra.mxu0 %v126
    %171 = vmatprep.subr.mxu0 0.0
    %172 = vmatpush1.msra.mxu0 %v127
    %173 = vmatprep.subr.mxu0 0.0
    %174 = vmatpush1.msra.mxu0 %v128
    %175 = vmatprep.subr.mxu0 0.0
    %176 = vmatpush1.msra.mxu0 %v129
    %177 = vmatprep.subr.mxu0 0.0
    %178 = vmatpush1.msra.mxu0 %v130
    %179 = vmatprep.subr.mxu0 0.0
    %180 = vmatpush1.msra.mxu0 %v131
    %181 = vmatprep.subr.mxu0 0.0
    %182 = vmatpush1.msra.mxu0 %v132
    %183 = vmatprep.subr.mxu0 0.0
    %184 = vmatpush1.msra.mxu0 %v133
    %185 = vmatprep.subr.mxu0 0.0
    %186 = vmatpush1.msra.mxu0 %v134
    %187 = vmatprep.subr.mxu0 0.0
    %188 = vmatpush1.msra.mxu0 %v135
    %189 = vmatprep.subr.mxu0 0.0
    %190 = vmatpush1.msra.mxu0 %v136
    %191 = vmatprep.subr.mxu0 0.0
    %192 = vmatpush1.msra.mxu0 %v137
    %193 = vmatprep.subr.mxu0 0.0
    %194 = vmatpush1.msra.mxu0 %v138
    %195 = vmatprep.subr.mxu0 0.0
    %196 = vmatpush1.msra.mxu0 %v139
    %197 = vmatprep.subr.mxu0 0.0
    %198 = vmatpush1.msra.mxu0 %v140
    %199 = vmatprep.subr.mxu0 0.0
    %200 = vmatpush1.msra.mxu0 0.0
    %201 = vmatprep.subr.mxu0 0.0
    %202 = vmatpush1.msra.mxu0 0.0
    %203 = vmatprep.subr.mxu0 0.0
    %204 = vmatpush1.msra.mxu0 0.0
    %205 = vmatprep.subr.mxu0 0.0
    %206 = vmatpush1.msra.mxu0 0.0
    %207 = vmatprep.subr.mxu0 0.0
    %208 = vmatpush1.msra.mxu0 0.0
    %209 = vmatprep.subr.mxu0 0.0
    %210 = vmatpush1.msra.mxu0 0.0
    %211 = vmatprep.subr.mxu0 0.0
    %212 = vmatpush1.msra.mxu0 0.0
    %213 = vmatprep.subr.mxu0 0.0
    %214 = vmatpush1.msra.mxu0 0.0
    %215 = vmatprep.mubr.f32.mxu0 %v141
    %216 = vmatmul.mubr.f32.gmra.mrb[0].mxu0 %v113
    %v217 = vpop.f32.mrb[0].mxu0
    %v218 = vadd.f32 0.0, %v217
    %v219 = vpop.f32.mrb[0].mxu0
    %220 = vmatprep.mubr.f32.mxu0 %v144
    %221 = vmatmul.mubr.f32.gmra.mrb[0].mxu0 %v114
    %v222 = vpop.f32.mrb[0].mxu0
    %v223 = vadd.f32 0.0, %v222
    %v224 = vpop.f32.mrb[0].mxu0
    %225 = vmatprep.mubr.f32.mxu0 %v146
    %226 = vmatmul.mubr.f32.gmra.mrb[0].mxu0 %v115
    %v227 = vpop.f32.mrb[0].mxu0
    %v228 = vadd.f32 0.0, %v227
    %v229 = vpop.f32.mrb[0].mxu0
    %230 = vmatprep.mubr.f32.mxu0 %v149
    %231 = vmatmul.mubr.f32.gmra.mrb[0].mxu0 %v116
    %v232 = vpop.f32.mrb[0].mxu0
    %v233 = vadd.f32 0.0, %v232
    %v234 = vpop.f32.mrb[0].mxu0
    %235 = vdwg.mxu0
    %v236 = vadd.f32 %v218, %v223
    %v237 = vadd.f32 %v236, %v228
    %v238 = vadd.f32 %v237, %v233
    %v239 = vrot.slane %v238, 4
    %v240 = vadd.f32 %v238, %v239
    %v241 = vrot.slane %v240, 2
    %v242 = vadd.f32 %v240, %v241
    %v243 = vrot.slane %v242, 1
    %v244 = vadd.f32 %v242, %v243
    %245 = vrot.lane.b32.xlu0 %v244, 8
    %v246 = vpop.permute.xlu0 %245
    %v247 = vadd.f32 %v244, %v246
    %248 = vrot.lane.b32.xlu0 %v247, 16
    %v249 = vpop.permute.xlu0 %248
    %v250 = vadd.f32 %v247, %v249
    %251 = vrot.lane.b32.xlu0 %v250, 32
    %v252 = vpop.permute.xlu0 %251
    %v253 = vadd.f32 %v250, %v252
    %254 = vrot.lane.b32.xlu0 %v253, 64
    %v255 = vpop.permute.xlu0 %254
    %v256 = vadd.f32 %v253, %v255
    %v257 = vmul.f32 %v256, 0.001953125
    %v258 = vlaneseq
    %v259 = vshrl.u32 %v258, 7
    %v260 = vsub.s32 0, %v259
    %v261 = vrot.slane %v257, %v260
    %v262 = vsub.f32 %v218, %v261
    %v263 = vsub.f32 %v223, %v261
    %v264 = vsub.f32 %v228, %v261
    %v265 = vsub.f32 %v233, %v261
    %v266 = vmul.f32 %v262, %v262
    %v267 = vmul.f32 %v263, %v263
    %v268 = vmul.f32 %v264, %v264
    %v269 = vmul.f32 %v265, %v265
    %v270 = vadd.f32 %v266, %v267
    %v271 = vadd.f32 %v270, %v268
    %v272 = vadd.f32 %v271, %v269
    %v273 = vrot.slane %v272, 4
    %v274 = vadd.f32 %v272, %v273
    %v275 = vrot.slane %v274, 2
    %v276 = vadd.f32 %v274, %v275
    %v277 = vrot.slane %v276, 1
    %v278 = vadd.f32 %v276, %v277
    %279 = vrot.lane.b32.xlu0 %v278, 8
    %v280 = vpop.permute.xlu0 %279
    %v281 = vadd.f32 %v278, %v280
    %282 = vrot.lane.b32.xlu0 %v281, 16
    %v283 = vpop.permute.xlu0 %282
    %v284 = vadd.f32 %v281, %v283
    %285 = vrot.lane.b32.xlu0 %v284, 32
    %v286 = vpop.permute.xlu0 %285
    %v287 = vadd.f32 %v284, %v286
    %288 = vrot.lane.b32.xlu0 %v287, 64
    %v289 = vpop.permute.xlu0 %288
    %v290 = vadd.f32 %v287, %v289
    %v291 = vmul.f32 %v290, 0.001953125
    %v292 = vadd.f32 %v291, 1e-05
    %v293 = vrsqrt.pop %v292
    %v294 = vlaneseq
    %v295 = vshrl.u32 %v294, 7
    %v296 = vsub.s32 0, %v295
    %v297 = vrot.slane %v293, %v296
    %v298 = vmul.f32 %v262, %v297
    %v299 = vmul.f32 %v263, %v297
    %v300 = vmul.f32 %v264, %v297
    %v301 = vmul.f32 %v265, %v297
    %v302 = vld [vmem:[%s3] sm:$0x1]
    %v304 = vlaneseq
    %v305 = vshrl.u32 %v304, 7
    %v306 = vsub.s32 0, %v305
    %v307 = vrot.slane %v302, %v306
    %v309 = vmul.f32 %v298, %v307
    %v310 = vmul.f32 %v299, %v307
    %v311 = vmul.f32 %v300, %v307
    %v312 = vmul.f32 %v301, %v307
    %v313 = vld [vmem:[%s4] sm:$0x1]
    %v315 = vlaneseq
    %v316 = vshrl.u32 %v315, 7
    %v317 = vsub.s32 0, %v316
    %v318 = vrot.slane %v313, %v317
    %v320 = vadd.f32 %v309, %v318
    %v321 = vadd.f32 %v310, %v318
    %v322 = vadd.f32 %v311, %v318
    %v323 = vadd.f32 %v312, %v318
    %v324 = vmax.f32 %v320, 0.0
    %v325 = vmax.f32 %v321, 0.0
    %v326 = vmax.f32 %v322, 0.0
    %v327 = vmax.f32 %v323, 0.0
    %v332 = vrot.slane %v324, 7
    %v333 = vrot.slane %v325, 7
    %v334 = vsel %vm76, %v332, %v333
    %v335 = vrot.slane %v326, 7
    %v336 = vrot.slane %v327, 7
    %v337 = vsel %vm76, %v335, %v336
    %v342 = vsel %vm76, 0.0, %v332
    %v343 = vsel %vm76, 0.0, %v335
    %v344 = vrot.slane %v324, 1
    %v345 = vrot.slane %v325, 1
    %v346 = vsel %vm89, %v344, %v345
    %v347 = vrot.slane %v326, 1
    %v348 = vrot.slane %v327, 1
    %v349 = vsel %vm89, %v347, %v348
    %v354 = vsel %vm89, %v345, 0.0
    %v355 = vsel %vm89, %v348, 0.0
    %v356 = vld [vmem:[#allocation7] sm:$0xff]
    %v357 = vld [vmem:[#allocation7 + $0x8] sm:$0xff]
    %v358 = vld [vmem:[#allocation7 + $0x10] sm:$0xff]
    %v359 = vld [vmem:[#allocation7 + $0x18] sm:$0xff]
    %v360 = vld [vmem:[#allocation7 + $0x20] sm:$0xff]
    %v361 = vld [vmem:[#allocation7 + $0x28] sm:$0xff]
    %v362 = vld [vmem:[#allocation7 + $0x30] sm:$0xff]
    %v363 = vld [vmem:[#allocation7 + $0x38] sm:$0xff]
    %v364 = vld [vmem:[#allocation7 + $0x40] sm:$0xff]
    %v365 = vld [vmem:[#allocation7 + $0x48] sm:$0xff]
    %v366 = vld [vmem:[#allocation7 + $0x50] sm:$0xff]
    %v367 = vld [vmem:[#allocation7 + $0x58] sm:$0xff]
    %v368 = vld [vmem:[#allocation7 + $0x60] sm:$0xff]
    %v369 = vld [vmem:[#allocation7 + $0x68] sm:$0xff]
    %v370 = vld [vmem:[#allocation7 + $0x70] sm:$0xff]
    %v371 = vld [vmem:[#allocation7 + $0x78] sm:$0xff]
    %v372 = vld [vmem:[#allocation7 + $0x80] sm:$0xff]
    %v373 = vld [vmem:[#allocation7 + $0x88] sm:$0xff]
    %v374 = vld [vmem:[#allocation7 + $0x90] sm:$0xff]
    %v375 = vld [vmem:[#allocation7 + $0x98] sm:$0xff]
    %v376 = vld [vmem:[#allocation7 + $0xa0] sm:$0xff]
    %v377 = vld [vmem:[#allocation7 + $0xa8] sm:$0xff]
    %v378 = vld [vmem:[#allocation7 + $0xb0] sm:$0xff]
    %v379 = vld [vmem:[#allocation7 + $0xb8] sm:$0xff]
    %v380 = vld [vmem:[#allocation7 + $0xc0] sm:$0xff]
    %v381 = vld [vmem:[#allocation7 + $0xc8] sm:$0xff]
    %v382 = vld [vmem:[#allocation7 + $0xd0] sm:$0xff]
    %v383 = vld [vmem:[#allocation7 + $0xd8] sm:$0xff]
    %v384 = vld [vmem:[#allocation7 + $0xe0] sm:$0xff]
    %v385 = vld [vmem:[#allocation7 + $0xe8] sm:$0xff]
    %v386 = vld [vmem:[#allocation7 + $0xf0] sm:$0xff]
    %v387 = vld [vmem:[#allocation7 + $0xf8] sm:$0xff]
    %v388 = vld [vmem:[#allocation7 + $0x100] sm:$0xff]
    %v389 = vld [vmem:[#allocation7 + $0x108] sm:$0xff]
    %v390 = vld [vmem:[#allocation7 + $0x110] sm:$0xff]
    %v391 = vld [vmem:[#allocation7 + $0x118] sm:$0xff]
    %v392 = vld [vmem:[#allocation7 + $0x120] sm:$0xff]
    %v393 = vld [vmem:[#allocation7 + $0x128] sm:$0xff]
    %v394 = vld [vmem:[#allocation7 + $0x130] sm:$0xff]
    %v395 = vld [vmem:[#allocation7 + $0x138] sm:$0xff]
    %v396 = vld [vmem:[#allocation7 + $0x140] sm:$0xff]
    %v397 = vld [vmem:[#allocation7 + $0x148] sm:$0xff]
    %v398 = vld [vmem:[#allocation7 + $0x150] sm:$0xff]
    %v399 = vld [vmem:[#allocation7 + $0x158] sm:$0xff]
    %v400 = vld [vmem:[#allocation7 + $0x160] sm:$0xff]
    %v401 = vld [vmem:[#allocation7 + $0x168] sm:$0xff]
    %v402 = vld [vmem:[#allocation7 + $0x170] sm:$0xff]
    %v403 = vld [vmem:[#allocation7 + $0x178] sm:$0xff]
    %404 = vmatprep.subr.mxu0 0.0
    %405 = vmatpush1.msra.mxu0 %v356
    %406 = vmatprep.subr.mxu0 0.0
    %407 = vmatpush1.msra.mxu0 %v357
    %408 = vmatprep.subr.mxu0 0.0
    %409 = vmatpush1.msra.mxu0 %v358
    %410 = vmatprep.subr.mxu0 0.0
    %411 = vmatpush1.msra.mxu0 %v359
    %412 = vmatprep.subr.mxu0 0.0
    %413 = vmatpush1.msra.mxu0 %v360
    %414 = vmatprep.subr.mxu0 0.0
    %415 = vmatpush1.msra.mxu0 %v361
    %416 = vmatprep.subr.mxu0 0.0
    %417 = vmatpush1.msra.mxu0 %v362
    %418 = vmatprep.subr.mxu0 0.0
    %419 = vmatpush1.msra.mxu0 %v363
    %420 = vmatprep.subr.mxu0 0.0
    %421 = vmatpush1.msra.mxu0 %v364
    %422 = vmatprep.subr.mxu0 0.0
    %423 = vmatpush1.msra.mxu0 %v365
    %424 = vmatprep.subr.mxu0 0.0
    %425 = vmatpush1.msra.mxu0 %v366
    %426 = vmatprep.subr.mxu0 0.0
    %427 = vmatpush1.msra.mxu0 %v367
    %428 = vmatprep.subr.mxu0 0.0
    %429 = vmatpush1.msra.mxu0 %v368
    %430 = vmatprep.subr.mxu0 0.0
    %431 = vmatpush1.msra.mxu0 %v369
    %432 = vmatprep.subr.mxu0 0.0
    %433 = vmatpush1.msra.mxu0 %v370
    %434 = vmatprep.subr.mxu0 0.0
    %435 = vmatpush1.msra.mxu0 %v371
    %436 = vmatprep.subr.mxu0 0.0
    %437 = vmatpush1.msra.mxu0 %v372
    %438 = vmatprep.subr.mxu0 0.0
    %439 = vmatpush1.msra.mxu0 %v373
    %440 = vmatprep.subr.mxu0 0.0
    %441 = vmatpush1.msra.mxu0 %v374
    %442 = vmatprep.subr.mxu0 0.0
    %443 = vmatpush1.msra.mxu0 %v375
    %444 = vmatprep.subr.mxu0 0.0
    %445 = vmatpush1.msra.mxu0 %v376
    %446 = vmatprep.subr.mxu0 0.0
    %447 = vmatpush1.msra.mxu0 %v377
    %448 = vmatprep.subr.mxu0 0.0
    %449 = vmatpush1.msra.mxu0 %v378
    %450 = vmatprep.subr.mxu0 0.0
    %451 = vmatpush1.msra.mxu0 %v379
    %452 = vmatprep.subr.mxu0 0.0
    %453 = vmatpush1.msra.mxu0 %v380
    %454 = vmatprep.subr.mxu0 0.0
    %455 = vmatpush1.msra.mxu0 %v381
    %456 = vmatprep.subr.mxu0 0.0
    %457 = vmatpush1.msra.mxu0 %v382
    %458 = vmatprep.subr.mxu0 0.0
    %459 = vmatpush1.msra.mxu0 %v383
    %460 = vmatprep.subr.mxu0 0.0
    %461 = vmatpush1.msra.mxu0 %v384
    %462 = vmatprep.subr.mxu0 0.0
    %463 = vmatpush1.msra.mxu0 %v385
    %464 = vmatprep.subr.mxu0 0.0
    %465 = vmatpush1.msra.mxu0 %v386
    %466 = vmatprep.subr.mxu0 0.0
    %467 = vmatpush1.msra.mxu0 %v387
    %468 = vmatprep.mubr.f32.mxu0 %v324
    %469 = vmatmul.mubr.f32.gmra.mrb[0].mxu0 %v342
    %v470 = vpop.f32.mrb[0].mxu0
    %v471 = vadd.f32 0.0, %v470
    %v472 = vpop.f32.mrb[0].mxu0
    %473 = vmatprep.mubr.f32.mxu0 %v325
    %474 = vmatmul.mubr.f32.gmra.mrb[0].mxu0 %v334
    %v475 = vpop.f32.mrb[0].mxu0
    %v476 = vadd.f32 0.0, %v475
    %v477 = vpop.f32.mrb[0].mxu0
    %478 = vmatprep.mubr.f32.mxu0 %v326
    %479 = vmatmul.mubr.f32.gmra.mrb[0].mxu0 %v343
    %v480 = vpop.f32.mrb[0].mxu0
    %v481 = vadd.f32 0.0, %v480
    %v482 = vpop.f32.mrb[0].mxu0
    %483 = vmatprep.mubr.f32.mxu0 %v327
    %484 = vmatmul.mubr.f32.gmra.mrb[0].mxu0 %v337
    %v485 = vpop.f32.mrb[0].mxu0
    %v486 = vadd.f32 0.0, %v485
    %v487 = vpop.f32.mrb[0].mxu0
    %488 = vdwg.mxu0
    %489 = vmatprep.subr.mxu0 0.0
    %490 = vmatpush1.msra.mxu0 %v388
    %491 = vmatprep.subr.mxu0 0.0
    %492 = vmatpush1.msra.mxu0 %v389
    %493 = vmatprep.subr.mxu0 0.0
    %494 = vmatpush1.msra.mxu0 %v390
    %495 = vmatprep.subr.mxu0 0.0
    %496 = vmatpush1.msra.mxu0 %v391
    %497 = vmatprep.subr.mxu0 0.0
    %498 = vmatpush1.msra.mxu0 %v392
    %499 = vmatprep.subr.mxu0 0.0
    %500 = vmatpush1.msra.mxu0 %v393
    %501 = vmatprep.subr.mxu0 0.0
    %502 = vmatpush1.msra.mxu0 %v394
    %503 = vmatprep.subr.mxu0 0.0
    %504 = vmatpush1.msra.mxu0 %v395
    %505 = vmatprep.subr.mxu0 0.0
    %506 = vmatpush1.msra.mxu0 %v396
    %507 = vmatprep.subr.mxu0 0.0
    %508 = vmatpush1.msra.mxu0 %v397
    %509 = vmatprep.subr.mxu0 0.0
    %510 = vmatpush1.msra.mxu0 %v398
    %511 = vmatprep.subr.mxu0 0.0
    %512 = vmatpush1.msra.mxu0 %v399
    %513 = vmatprep.subr.mxu0 0.0
    %514 = vmatpush1.msra.mxu0 %v400
    %515 = vmatprep.subr.mxu0 0.0
    %516 = vmatpush1.msra.mxu0 %v401
    %517 = vmatprep.subr.mxu0 0.0
    %518 = vmatpush1.msra.mxu0 %v402
    %519 = vmatprep.subr.mxu0 0.0
    %520 = vmatpush1.msra.mxu0 %v403
    %521 = vmatprep.subr.mxu0 0.0
    %522 = vmatpush1.msra.mxu0 0.0
    %523 = vmatprep.subr.mxu0 0.0
    %524 = vmatpush1.msra.mxu0 0.0
    %525 = vmatprep.subr.mxu0 0.0
    %526 = vmatpush1.msra.mxu0 0.0
    %527 = vmatprep.subr.mxu0 0.0
    %528 = vmatpush1.msra.mxu0 0.0
    %529 = vmatprep.subr.mxu0 0.0
    %530 = vmatpush1.msra.mxu0 0.0
    %531 = vmatprep.subr.mxu0 0.0
    %532 = vmatpush1.msra.mxu0 0.0
    %533 = vmatprep.subr.mxu0 0.0
    %534 = vmatpush1.msra.mxu0 0.0
    %535 = vmatprep.subr.mxu0 0.0
    %536 = vmatpush1.msra.mxu0 0.0
    %537 = vmatprep.subr.mxu0 0.0
    %538 = vmatpush1.msra.mxu0 0.0
    %539 = vmatprep.subr.mxu0 0.0
    %540 = vmatpush1.msra.mxu0 0.0
    %541 = vmatprep.subr.mxu0 0.0
    %542 = vmatpush1.msra.mxu0 0.0
    %543 = vmatprep.subr.mxu0 0.0
    %544 = vmatpush1.msra.mxu0 0.0
    %545 = vmatprep.subr.mxu0 0.0
    %546 = vmatpush1.msra.mxu0 0.0
    %547 = vmatprep.subr.mxu0 0.0
    %548 = vmatpush1.msra.mxu0 0.0
    %549 = vmatprep.subr.mxu0 0.0
    %550 = vmatpush1.msra.mxu0 0.0
    %551 = vmatprep.subr.mxu0 0.0
    %552 = vmatpush1.msra.mxu0 0.0
    %553 = vmatprep.mubr.f32.mxu0 0.0
    %554 = vmatmul.mubr.f32.gmra.mrb[0].mxu0 %v346
    %v555 = vpop.f32.mrb[0].mxu0
    %v556 = vadd.f32 %v471, %v555
    %v557 = vpop.f32.mrb[0].mxu0
    %558 = vmatprep.mubr.f32.mxu0 0.0
    %559 = vmatmul.mubr.f32.gmra.mrb[0].mxu0 %v354
    %v560 = vpop.f32.mrb[0].mxu0
    %v561 = vadd.f32 %v476, %v560
    %v562 = vpop.f32.mrb[0].mxu0
    %563 = vmatprep.mubr.f32.mxu0 0.0
    %564 = vmatmul.mubr.f32.gmra.mrb[0].mxu0 %v349
    %v565 = vpop.f32.mrb[0].mxu0
    %v566 = vadd.f32 %v481, %v565
    %v567 = vpop.f32.mrb[0].mxu0
    %568 = vmatprep.mubr.f32.mxu0 0.0
    %569 = vmatmul.mubr.f32.gmra.mrb[0].mxu0 %v355
    %v570 = vpop.f32.mrb[0].mxu0
    %v571 = vadd.f32 %v486, %v570
    %v572 = vpop.f32.mrb[0].mxu0
    %573 = vdwg.mxu0
    %v574 = vadd.f32 %v556, %v561
    %v575 = vadd.f32 %v574, %v566
    %v576 = vadd.f32 %v575, %v571
    %v577 = vrot.slane %v576, 4
    %v578 = vadd.f32 %v576, %v577
    %v579 = vrot.slane %v578, 2
    %v580 = vadd.f32 %v578, %v579
    %v581 = vrot.slane %v580, 1
    %v582 = vadd.f32 %v580, %v581
    %583 = vrot.lane.b32.xlu0 %v582, 8
    %v584 = vpop.permute.xlu0 %583
    %v585 = vadd.f32 %v582, %v584
    %586 = vrot.lane.b32.xlu0 %v585, 16
    %v587 = vpop.permute.xlu0 %586
    %v588 = vadd.f32 %v585, %v587
    %589 = vrot.lane.b32.xlu0 %v588, 32
    %v590 = vpop.permute.xlu0 %589
    %v591 = vadd.f32 %v588, %v590
    %592 = vrot.lane.b32.xlu0 %v591, 64
    %v593 = vpop.permute.xlu0 %592
    %v594 = vadd.f32 %v591, %v593
    %v595 = vmul.f32 %v594, 0.001953125
    %v596 = vlaneseq
    %v597 = vshrl.u32 %v596, 7
    %v598 = vsub.s32 0, %v597
    %v599 = vrot.slane %v595, %v598
    %v600 = vsub.f32 %v556, %v599
    %v601 = vsub.f32 %v561, %v599
    %v602 = vsub.f32 %v566, %v599
    %v603 = vsub.f32 %v571, %v599
    %v604 = vmul.f32 %v600, %v600
    %v605 = vmul.f32 %v601, %v601
    %v606 = vmul.f32 %v602, %v602
    %v607 = vmul.f32 %v603, %v603
    %v608 = vadd.f32 %v604, %v605
    %v609 = vadd.f32 %v608, %v606
    %v610 = vadd.f32 %v609, %v607
    %v611 = vrot.slane %v610, 4
    %v612 = vadd.f32 %v610, %v611
    %v613 = vrot.slane %v612, 2
    %v614 = vadd.f32 %v612, %v613
    %v615 = vrot.slane %v614, 1
    %v616 = vadd.f32 %v614, %v615
    %617 = vrot.lane.b32.xlu0 %v616, 8
    %v618 = vpop.permute.xlu0 %617
    %v619 = vadd.f32 %v616, %v618
    %620 = vrot.lane.b32.xlu0 %v619, 16
    %v621 = vpop.permute.xlu0 %620
    %v622 = vadd.f32 %v619, %v621
    %623 = vrot.lane.b32.xlu0 %v622, 32
    %v624 = vpop.permute.xlu0 %623
    %v625 = vadd.f32 %v622, %v624
    %626 = vrot.lane.b32.xlu0 %v625, 64
    %v627 = vpop.permute.xlu0 %626
    %v628 = vadd.f32 %v625, %v627
    %v629 = vmul.f32 %v628, 0.001953125
    %v630 = vadd.f32 %v629, 1e-05
    %v631 = vrsqrt.pop %v630
    %v632 = vlaneseq
    %v633 = vshrl.u32 %v632, 7
    %v634 = vsub.s32 0, %v633
    %v635 = vrot.slane %v631, %v634
    %v636 = vmul.f32 %v600, %v635
    %v637 = vmul.f32 %v601, %v635
    %v638 = vmul.f32 %v602, %v635
    %v639 = vmul.f32 %v603, %v635
    %v640 = vld [vmem:[%s5] sm:$0x1]
    %v642 = vlaneseq
    %v643 = vshrl.u32 %v642, 7
    %v644 = vsub.s32 0, %v643
    %v645 = vrot.slane %v640, %v644
    %v647 = vmul.f32 %v636, %v645
    %v648 = vmul.f32 %v637, %v645
    %v649 = vmul.f32 %v638, %v645
    %v650 = vmul.f32 %v639, %v645
    %v651 = vld [vmem:[%s6] sm:$0x1]
    %v653 = vlaneseq
    %v654 = vshrl.u32 %v653, 7
    %v655 = vsub.s32 0, %v654
    %v656 = vrot.slane %v651, %v655
    %v658 = vadd.f32 %v647, %v656
    %v659 = vadd.f32 %v648, %v656
    %v660 = vadd.f32 %v649, %v656
    %v661 = vadd.f32 %v650, %v656
    %662 = vst [vmem:[#allocation8] sm:$0xff] %v658
    %663 = vst [vmem:[#allocation8 + $0x8] sm:$0xff] %v659
    %664 = vst [vmem:[#allocation8 + $0x10] sm:$0xff] %v660
    %665 = vst [vmem:[#allocation8 + $0x18] sm:$0xff] %v661
    // Predicated region
    $region42: #{tpu_custom_call.1} parent=1 // pred_check
      _
    $region43: #{tpu_custom_call.1} parent=1 // pred_check_branch
      %667 = sbr.rel (0) target = $region45
    $region44: #{tpu_custom_call.1} parent=1 // pred_region
      %s669 = ssub.s32 512, 512
      %670 = vsyncadd [#allocation4], %s669
      %s671 = sshll.u32 [#allocation8], 4
      %s672 = int_to_ptr.vmem [resolvable:$true] %s671
      %677 = dma.vmem_to_hbm [thread:$0]  %s672, 512, %s7, [#allocation4], 128, 128, 8
    $region45: #{tpu_custom_call.1} parent=1 // pred_fallthru
      _
    // Predicated region
    $region46: #{tpu_custom_call.1} parent=1 // pred_check
      _
    $region47: #{tpu_custom_call.1} parent=1 // pred_check_branch
      %679 = sbr.rel (0) target = $region49
    $region48: #{tpu_custom_call.1} parent=1 // pred_region
      %680 = dma.done [#allocation4], 512
    $region49: #{tpu_custom_call.1} parent=1 // pred_fallthru
      _
    %681 = vsyncpa [#allocation3], 1
    %682 = vsyncpa [#allocation6], 1
    %683 = vsyncpa [#allocation4], 1

</llo_original>
